<compile_context>
chip_gen: v5e
topology: v5e:2x2
jax: 0.10.0
libtpu: 0.0.40
codegen_flags: <defaults>
</compile_context>

<pallas_src>
import functools
import math

import numpy as np
import jax
import jax.numpy as jnp
from jax.experimental import pallas as pl
from jax.experimental.pallas import tpu as pltpu

_LANES = 128
_F32_TINY = float(np.finfo(np.float32).tiny)   # smallest normal float32


def _make_gamma_kernel(color_space):
    """Elementwise clamp -> gamma-encode -> clamp kernel (VPU/EUP only)."""

    def kernel(x_ref, o_ref):
        x = x_ref[...].astype(jnp.float32)
        x = jnp.clip(x, 0.0, 1.0)
        # Guard log2 against exact zeros. With tiny = float32 smallest normal,
        # the guarded branch evaluates to ~4e-18 for 0 < x < tiny (negligible),
        # and the linear/zero branch of jnp.where covers that range anyway.
        xs = jnp.maximum(x, _F32_TINY)
        if color_space == 0:      # sRGB (IEC 61966-2-1)
            y = jnp.where(
                x <= 0.0031308,
                12.92 * x,
                1.055 * jnp.exp2(jnp.log2(xs) * (1.0 / 2.4)) - 0.055,
            )
        elif color_space == 1:    # Adobe RGB (1998): pure power 1/2.19921875
            y = jnp.where(
                x <= 0.0,
                0.0,
                jnp.exp2(jnp.log2(xs) * (1.0 / 2.19921875)),
            )
        elif color_space == 2:    # ProPhoto RGB (ROMM)
            y = jnp.where(
                x < (1.0 / 512.0),
                16.0 * x,
                jnp.exp2(jnp.log2(xs) * (1.0 / 1.8)),
            )
        else:
            raise ValueError(f"unsupported ColorSpace={color_space}")
        o_ref[...] = jnp.clip(y, 0.0, 1.0).astype(o_ref.dtype)

    return kernel


@functools.partial(jax.jit, static_argnames=("color_space", "block_rows"))
def gamma_correct_forward(x, color_space=0, block_rows=8192):
    """Pallas equivalent of GammaCorrect(ColorSpace=color_space).forward(x).

    x: any-shape floating-point array (e.g. NCHW image). Returns same shape/dtype.
    """
    assert jnp.issubdtype(x.dtype, jnp.floating), "gamma expects a float input"
    orig_shape = x.shape
    orig_dtype = x.dtype

    n = math.prod(orig_shape)
    rows = pl.cdiv(n, _LANES)

    itemsize = jnp.dtype(orig_dtype).itemsize
    # 16-bit dtypes pack (16,128) per vreg tile: align sublanes to 16 and double
    # the rows per block so per-step DMA bytes match the f32 configuration.
    sub_align = 16 if itemsize == 2 else 8
    eff_block_rows = block_rows * (2 if itemsize == 2 else 1)

    # Block = (tr, 128); tr a multiple of the sublane packing (unmasked stores).
    tr = min(eff_block_rows, ((rows + sub_align - 1) // sub_align) * sub_align)

    # Only pad when numel isn't a multiple of 128 lanes (rare); the ragged last
    # row-block is handled by Pallas itself (padded read, partial write).
    needs_pad = (n % _LANES) != 0
    if needs_pad:
        xf = jnp.pad(x.reshape(-1), (0, rows * _LANES - n))
        x2d = xf.reshape(rows, _LANES)
    else:
        x2d = x.reshape(rows, _LANES)

    out2d = pl.pallas_call(
        _make_gamma_kernel(color_space),
        out_shape=jax.ShapeDtypeStruct((rows, _LANES), orig_dtype),
        grid=(pl.cdiv(rows, tr),),
        in_specs=[pl.BlockSpec((tr, _LANES), lambda i: (i, 0))],
        out_specs=pl.BlockSpec((tr, _LANES), lambda i: (i, 0)),
        compiler_params=pltpu.CompilerParams(
            dimension_semantics=("parallel",),   # lets v7x shard over its 2 TCs
            vmem_limit_bytes=32 * 1024 * 1024,   # <= default on v6e/v7x; helps v5e
        ),
    )(x2d)

    if needs_pad:
        return out2d.reshape(-1)[:n].reshape(orig_shape)
    return out2d.reshape(orig_shape)


def _gamma_ref(x, color_space=0):
    """Pure-JAX reference for correctness checking."""
    x = jnp.clip(x.astype(jnp.float32), 0.0, 1.0)
    if color_space == 0:
        y = jnp.where(x <= 0.0031308, 12.92 * x,
                      1.055 * jnp.power(x, 1.0 / 2.4) - 0.055)
    elif color_space == 1:
        y = jnp.where(x <= 0.0, 0.0, jnp.power(x, 1.0 / 2.19921875))
    elif color_space == 2:
        y = jnp.where(x < (1.0 / 512.0), 16.0 * x, jnp.power(x, 1.0 / 1.8))
    else:
        raise ValueError(color_space)
    return jnp.clip(y, 0.0, 1.0)


if __name__ == "__main__":
    key = jax.random.PRNGKey(0)
    k1, k2 = jax.random.split(key)
    # Small RGB image batches consistent with the module (NCHW). Values slightly
    # outside [0, 1] to exercise the clamps. Second shape has numel % 128 != 0
    # to exercise the (rare) pad path.
    test_inputs = [
        jax.random.uniform(k1, (2, 3, 16, 16), dtype=jnp.float32,
                           minval=-0.1, maxval=1.1),
        jax.random.uniform(k2, (2, 3, 15, 17), dtype=jnp.float32,
                           minval=-0.1, maxval=1.1),
    ]

    ok = True
    for x in test_inputs:
        for cs in (0, 1, 2):
            out = gamma_correct_forward(x, color_space=cs)
            out = jax.block_until_ready(out)
            ref = _gamma_ref(x, cs).astype(x.dtype)
            assert out.shape == x.shape and out.dtype == x.dtype
            err = float(jnp.max(jnp.abs(out.astype(jnp.float32) - ref)))
            ok = ok and (err < 1e-5)

    assert ok, "mismatch vs reference"
    print("KERNEL_OK")
</pallas_src>

<mosaic_0001>
module attributes {stable_mosaic.version = 11 : i64} {
  func.func @kernel(%arg0: i32, %arg1: memref<16x128xf32, #tpu.memory_space<vmem>>, %arg2: memref<16x128xf32, #tpu.memory_space<vmem>>) attributes {dimension_semantics = [#tpu.dimension_semantics<parallel>], iteration_bounds = array<i64: 1>, scalar_prefetch = 0 : i64, scratch_operands = 0 : i64, tpu.core_type = #tpu.core_type<tc>, window_params = [{transform_indices = @transform_0, window_bounds = array<i64: 16, 128>}, {transform_indices = @transform_1, window_bounds = array<i64: 16, 128>}]} {
    %c0 = arith.constant 0 : index
    %c0_0 = arith.constant 0 : index
    %0 = vector.load %arg1[%c0, %c0_0] : memref<16x128xf32, #tpu.memory_space<vmem>>, vector<16x128xf32>
    %cst = arith.constant 0.000000e+00 : f32
    %cst_1 = arith.constant 1.000000e+00 : f32
    %1 = vector.broadcast %cst : f32 to vector<16x128xf32>
    %2 = arith.maximumf %1, %0 : vector<16x128xf32>
    %3 = vector.broadcast %cst_1 : f32 to vector<16x128xf32>
    %4 = arith.minimumf %3, %2 : vector<16x128xf32>
    %cst_2 = arith.constant 1.17549435E-38 : f32
    %5 = vector.broadcast %cst_2 : f32 to vector<16x128xf32>
    %6 = arith.maximumf %4, %5 : vector<16x128xf32>
    %cst_3 = arith.constant 3.130800e-03 : f32
    %7 = vector.broadcast %cst_3 : f32 to vector<16x128xf32>
    %8 = arith.cmpf ole, %4, %7 : vector<16x128xf32>
    %cst_4 = arith.constant 1.292000e+01 : f32
    %9 = vector.broadcast %cst_4 : f32 to vector<16x128xf32>
    %10 = arith.mulf %9, %4 : vector<16x128xf32>
    %11 = math.log %6 : vector<16x128xf32>
    %cst_5 = arith.constant 2.000000e+00 : f32
    %12 = math.log %cst_5 : f32
    %13 = vector.broadcast %12 : f32 to vector<16x128xf32>
    %14 = arith.divf %11, %13 : vector<16x128xf32>
    %cst_6 = arith.constant 0.416666657 : f32
    %15 = vector.broadcast %cst_6 : f32 to vector<16x128xf32>
    %16 = arith.mulf %14, %15 : vector<16x128xf32>
    %17 = math.exp2 %16 : vector<16x128xf32>
    %cst_7 = arith.constant 1.055000e+00 : f32
    %18 = vector.broadcast %cst_7 : f32 to vector<16x128xf32>
    %19 = arith.mulf %18, %17 : vector<16x128xf32>
    %cst_8 = arith.constant 5.500000e-02 : f32
    %20 = vector.broadcast %cst_8 : f32 to vector<16x128xf32>
    %21 = arith.subf %19, %20 : vector<16x128xf32>
    %22 = arith.select %8, %10, %21 : vector<16x128xi1>, vector<16x128xf32>
    %cst_9 = arith.constant 0.000000e+00 : f32
    %cst_10 = arith.constant 1.000000e+00 : f32
    %23 = vector.broadcast %cst_9 : f32 to vector<16x128xf32>
    %24 = arith.maximumf %23, %22 : vector<16x128xf32>
    %25 = vector.broadcast %cst_10 : f32 to vector<16x128xf32>
    %26 = arith.minimumf %25, %24 : vector<16x128xf32>
    %c0_11 = arith.constant 0 : index
    %c0_12 = arith.constant 0 : index
    %27 = vector.load %arg2[%c0_11, %c0_12] : memref<16x128xf32, #tpu.memory_space<vmem>>, vector<16x128xf32>
    tpu.vector_store %arg2[%c0_11, %c0_12], %26 {strides = array<i32>} : memref<16x128xf32, #tpu.memory_space<vmem>>, vector<16x128xf32>,
    return
  }
  func.func @transform_0(%arg0: i32) -> (i32, i32) {
    %c0_i32 = arith.constant 0 : i32
    %c0_i32_0 = arith.constant 0 : i32
    return %arg0, %c0_i32 : i32, i32
  }
  func.func @transform_1(%arg0: i32) -> (i32, i32) {
    %c0_i32 = arith.constant 0 : i32
    %c0_i32_0 = arith.constant 0 : i32
    return %arg0, %c0_i32 : i32, i32
  }
}

</mosaic_0001>

<llo_original>
// kernel: gamma_correct_forward.1
$region0: #{gamma_correct_forward.1}
  #allocation0 [shape = 'u32[]', space=smem, size = 0x4, offset = 0x4, fixed_abs, tag = 'smem constant byte address 0x4 - core index']
  #allocation1 [shape = 'u32[72,128]{1,0:T(1,128)}', space=vmem, size = 0x9000, scoped, tag = 'internal scratch']
  %s0 = inlined_call_operand.vmem [shape: f32[12,128], index: 0, kind: input, shape index: {}]
  %s1 = inlined_call_operand.vmem [shape: f32[12,128], index: 1, kind: output, shape index: {}]
  %s2 = sld [smem:[#allocation0]]
  $region14: #{gamma_correct_forward.1} parent=0
    _
  %s4 = ssub.s32 1, %s2
  %s5 = scalar_select 0, %s4, %s2
  // Predicated region
  $region2: #{gamma_correct_forward.1} parent=0 // pred_check
    _
  $region3: #{gamma_correct_forward.1} parent=0 // pred_check_branch
    %7 = sbr.rel (0) target = $region5
  $region4: #{gamma_correct_forward.1} parent=0 // pred_region
    _
  $region5: #{gamma_correct_forward.1} parent=0 // pred_fallthru
    _
  %v8 = vld [vmem:[%s0] sm:$0xff]
  %v9 = vld [vmem:[%s0 + $0x8] sm:$0xff]
  %v10 = vmax.f32 %v8, 0.0
  %v11 = vmax.f32 %v9, 0.0
  %v12 = vmin.f32 %v10, 1.0
  %v13 = vmin.f32 %v11, 1.0
  %v14 = vmax.f32 %v12, 1.1754944e-38
  %v15 = vmax.f32 %v13, 1.1754944e-38
  %vm16 = vcmp.le.f32.partialorder %v12, 0.0031308
  %vm17 = vcmp.le.f32.partialorder %v13, 0.0031308
  %v18 = vmul.f32 %v12, 12.92
  %v19 = vmul.f32 %v13, 12.92
  %v20 = vlog2.pop %v14
  %v21 = vmul.f32 %v20, 0.6931472
  %v22 = vlog2.pop %v15
  %v23 = vmul.f32 %v22, 0.6931472
  %v24 = vrcp.pop 0.6931472
  %v25 = vmul.f32 0.6931472, %v24
  %v26 = vsub.f32 1.0, %v25
  %v27 = vmul.f32 %v24, %v26
  %v28 = vadd.f32 %v24, %v27
  %vm29 = vweird.f32 %v24
  %v30 = vsel %vm29, %v24, %v28
  %v31 = vmul.f32 %v21, %v30
  %v32 = vmul.f32 %v23, %v30
  %v33 = vmul.f32 %v31, 0.41666666
  %v34 = vmul.f32 %v32, 0.41666666
  %v35 = vpow.pop %v33
  %v36 = vpow.pop %v34
  %v37 = vmul.f32 %v35, 1.055
  %v38 = vmul.f32 %v36, 1.055
  %v39 = vsub.f32 %v37, 0.055
  %v40 = vsub.f32 %v38, 0.055
  %v41 = vsel %vm16, %v18, %v39
  %v42 = vsel %vm17, %v19, %v40
  %v43 = vmax.f32 %v41, 0.0
  %v44 = vmax.f32 %v42, 0.0
  %v45 = vmin.f32 %v43, 1.0
  %v46 = vmin.f32 %v44, 1.0
  %47 = vst [vmem:[%s1] sm:$0xff] %v45
  %48 = vst [vmem:[%s1 + $0x8] sm:$0xff] %v46
  // Predicated region
  $region6: #{gamma_correct_forward.1} parent=0 // pred_check
    _
  $region7: #{gamma_correct_forward.1} parent=0 // pred_check_branch
    %50 = sbr.rel (0) target = $region9
  $region8: #{gamma_correct_forward.1} parent=0 // pred_region
    _
  $region9: #{gamma_correct_forward.1} parent=0 // pred_fallthru
    _
  // Predicated region
  $region10: #{gamma_correct_forward.1} parent=0 // pred_check
    _
  $region11: #{gamma_correct_forward.1} parent=0 // pred_check_branch
    %52 = sbr.rel (0) target = $region13
  $region12: #{gamma_correct_forward.1} parent=0 // pred_region
    _
  $region13: #{gamma_correct_forward.1} parent=0 // pred_fallthru
    _

</llo_original>
